<compile_context>
chip_gen: v5e
topology: v5e:2x2
jax: 0.10.0
libtpu: 0.0.40
codegen_flags: <defaults>
</compile_context>

<pallas_src>
import functools

import jax
import jax.numpy as jnp
from jax.experimental import pallas as pl
from jax.experimental.pallas import tpu as pltpu


def _round_up(x, m):
    return ((x + m - 1) // m) * m


def _fused_embed_kernel(idx_ref, tab_ref, out_ref, *, nsel):
    # idx_ref: [nidx, TNr] int32 -- pre-offset rows of the combined table, transposed
    #          (lane-dense).  Rows >= nsel and padded tokens hold -1 (match nothing).
    # tab_ref: [K, W]            -- block-diagonal combined embedding table (VMEM-resident).
    # out_ref: [TNr, W]          -- W is a multiple of 128 (unmasked lane-dense stores).
    idx_t = jnp.transpose(idx_ref[...])              # [TNr, nidx]; small XLU relayout
    tab = tab_ref[...]
    k = tab.shape[0]

    # One iota vreg row, broadcast against each index column; accumulate the (disjoint)
    # hits as bool and convert to the matmul dtype exactly once.
    iota = jax.lax.broadcasted_iota(jnp.int32, (1, k), 1)
    hot = idx_t[:, 0:1] == iota
    for c in range(1, nsel):
        hot = hot | (idx_t[:, c:c + 1] == iota)
    one = jnp.ones((), tab.dtype)
    zero = jnp.zeros((), tab.dtype)
    onehot = jnp.where(hot, one, zero)

    out_ref[...] = jnp.dot(
        onehot, tab, preferred_element_type=jnp.float32
    ).astype(out_ref.dtype)


def make_unit_type_hp_embedding(utype_table, hp_table, *,
                                table_dtype=jnp.float32,
                                out_dtype=jnp.float32,
                                tile_rows=4096,
                                vmem_limit_bytes=32 * 1024 * 1024):
    """Returns a jitted apply(utype, hp) -> [B, U, 2E] for fixed embedding tables.

    tile_rows: 4096 is safe on all generations (keeps >=2 grid steps on v7x for
    realistic N); 8192 is recommended on v5e/v6e (128 MiB VMEM).
    table_dtype/out_dtype=bfloat16 halves the dominant HBM store and uses the native
    bf16 MXU path (only table rounding changes) -- recommended on v5e/v6e.
    """
    num_utype, emb_dim = utype_table.shape
    num_hp_bins, emb_dim2 = hp_table.shape
    assert emb_dim == emb_dim2
    assert tile_rows % 128 == 0
    two_e = 2 * emb_dim

    # Lane-dense output geometry: pack P tokens per 128-wide row when possible,
    # otherwise zero-pad the row width up to a multiple of 128 lanes.
    if two_e % 128 == 0:
        P, W = 1, two_e
    elif two_e < 128 and 128 % two_e == 0:
        P, W = 128 // two_e, 128
    else:
        P, W = 1, _round_up(two_e, 128)

    Kt = num_utype + num_hp_bins                 # combined-table rows per packed token
    K = _round_up(P * Kt, 8)

    # Block-diagonal combined table [K, W]; depends only on the weights, built once here.
    tab = jnp.zeros((K, W), table_dtype)
    ut = utype_table.astype(table_dtype)
    hpt = hp_table.astype(table_dtype)
    for j in range(P):
        r0, c0 = j * Kt, j * two_e
        tab = tab.at[r0:r0 + num_utype, c0:c0 + emb_dim].set(ut)
        tab = tab.at[r0 + num_utype:r0 + Kt, c0 + emb_dim:c0 + two_e].set(hpt)

    nidx = _round_up(2 * P, 8)                   # sublane-padded index rows
    out_bytes = jnp.dtype(out_dtype).itemsize
    tab_bytes = jnp.dtype(table_dtype).itemsize

    def apply(utype, hp):
        B, U = utype.shape
        N = B * U
        n_rows = -(-N // P)
        n_rows_pad = _round_up(n_rows, 8)
        n_tok_pad = n_rows_pad * P

        # --- indices: clamp, bin, offset into the combined table ---
        u_flat = jnp.clip(jnp.ravel(utype).astype(jnp.int32), 0, num_utype - 1)
        hp_flat = jnp.ravel(hp).astype(jnp.float32)
        # trunc-toward-zero matches torch .long() for hp in [0, 1]; clip guards
        # out-of-range / NaN hp (NaN -> bin 0).
        h_flat = jnp.clip((hp_flat * float(num_hp_bins - 1)).astype(jnp.int32),
                          0, num_hp_bins - 1)
        if P > 1:
            slot = jnp.arange(N, dtype=jnp.int32) % P
        else:
            slot = jnp.zeros((N,), jnp.int32)
        u_off = u_flat + slot * Kt
        h_off = h_flat + slot * Kt + num_utype
        pad = n_tok_pad - N
        if pad:
            # -1 never matches a table row -> padded slots produce zero output.
            u_off = jnp.pad(u_off, (0, pad), constant_values=-1)
            h_off = jnp.pad(h_off, (0, pad), constant_values=-1)

        # Transposed, lane-dense index layout [nidx, n_rows_pad].
        u2t = u_off.reshape(n_rows_pad, P).T
        h2t = h_off.reshape(n_rows_pad, P).T
        idx_t = jnp.concatenate(
            [u2t, h2t, jnp.full((nidx - 2 * P, n_rows_pad), -1, jnp.int32)], axis=0)

        # --- tile geometry (ragged last block allowed) ---
        TNr = n_rows_pad if n_rows_pad <= tile_rows else tile_rows
        grid = (-(-n_rows_pad // TNr),)

        kernel = functools.partial(_fused_embed_kernel, nsel=2 * P)
        cost = pl.CostEstimate(
            flops=2 * n_rows_pad * K * W,
            transcendentals=0,
            bytes_accessed=(nidx * n_rows_pad * 4
                            + n_rows_pad * W * out_bytes
                            + K * W * tab_bytes),
        )
        out2 = pl.pallas_call(
            kernel,
            out_shape=jax.ShapeDtypeStruct((n_rows_pad, W), out_dtype),
            grid_spec=pltpu.PrefetchScalarGridSpec(
                num_scalar_prefetch=0,
                grid=grid,
                in_specs=[
                    pl.BlockSpec((nidx, TNr), lambda i: (0, i)),   # indices (transposed)
                    pl.BlockSpec((K, W), lambda i: (0, 0)),        # table, VMEM-resident
                ],
                out_specs=pl.BlockSpec((TNr, W), lambda i: (i, 0)),
            ),
            compiler_params=pltpu.CompilerParams(
                dimension_semantics=("parallel",),
                vmem_limit_bytes=vmem_limit_bytes,
            ),
            cost_estimate=cost,
        )(idx_t, tab)

        # [n_rows_pad, W] -> [tokens, 2E]; the reshape is a free row-major reinterpretation.
        out_flat = out2.reshape(n_rows_pad * P, W // P)
        if W // P != two_e:
            out_flat = out_flat[:, :two_e]       # only in the padded-width fallback
        if n_tok_pad != N:
            # Only when padding exists; for typical shapes this slice never runs.
            out_flat = out_flat[:N]
        return out_flat.reshape(B, U, two_e)

    return jax.jit(apply)


if __name__ == "__main__":
    batch = 2
    num_padded_unit = 8
    num_utype = 16
    num_hp_bins = 8
    emb_dim = 32

    key = jax.random.PRNGKey(0)
    k_ut_tab, k_hp_tab, k_utype, k_hp = jax.random.split(key, 4)

    # Deterministic parameter init (nn.Embedding default ~ N(0, 1)).
    utype_table = jax.random.normal(k_ut_tab, (num_utype, emb_dim), jnp.float32)
    hp_table = jax.random.normal(k_hp_tab, (num_hp_bins, emb_dim), jnp.float32)

    # Inputs.
    utype = jax.random.randint(
        k_utype, (batch, num_padded_unit), 0, num_utype, dtype=jnp.int32)
    hp = jax.random.uniform(k_hp, (batch, num_padded_unit), jnp.float32)

    # Plain-JAX reference (exact module semantics).
    ref_type = jnp.take(utype_table, utype, axis=0)
    hp_idx = (hp * (num_hp_bins - 1)).astype(jnp.int32)
    ref_hp = jnp.take(hp_table, hp_idx, axis=0)
    ref = jnp.concatenate([ref_type, ref_hp], axis=2)

    # --- f32 path (module-faithful dtypes) ---
    embed_f32 = make_unit_type_hp_embedding(utype_table, hp_table)
    out = jax.block_until_ready(embed_f32(utype, hp))
    assert out.shape == (batch, num_padded_unit, 2 * emb_dim)
    assert out.dtype == jnp.float32
    assert jnp.allclose(out, ref, atol=1e-3, rtol=1e-3)

    # --- bf16 path (perf-review option for v5e/v6e: halved store, native bf16 MXU) ---
    embed_bf16 = make_unit_type_hp_embedding(
        utype_table, hp_table, table_dtype=jnp.bfloat16, out_dtype=jnp.bfloat16)
    out_bf = jax.block_until_ready(embed_bf16(utype, hp))
    ref_bf = jnp.concatenate(
        [jnp.take(utype_table.astype(jnp.bfloat16), utype, axis=0),
         jnp.take(hp_table.astype(jnp.bfloat16), hp_idx, axis=0)], axis=2)
    assert jnp.allclose(out_bf.astype(jnp.float32), ref_bf.astype(jnp.float32),
                        atol=1e-2, rtol=1e-2)

    print("KERNEL_OK")
</pallas_src>

<mosaic_0001>
module attributes {stable_mosaic.version = 11 : i64} {
  func.func @_fused_embed_kernel(%arg0: i32, %arg1: memref<8x8xi32, #tpu.memory_space<vmem>>, %arg2: memref<48x128xf32, #tpu.memory_space<vmem>>, %arg3: memref<8x128xf32, #tpu.memory_space<vmem>>) attributes {dimension_semantics = [#tpu.dimension_semantics<parallel>], iteration_bounds = array<i64: 1>, scalar_prefetch = 0 : i64, scratch_operands = 0 : i64, tpu.core_type = #tpu.core_type<tc>, window_params = [{transform_indices = @transform_0, window_bounds = array<i64: 8, 8>}, {pipeline_mode = #tpu.pipeline_mode<synchronous>, transform_indices = @transform_1, window_bounds = array<i64: 48, 128>}, {transform_indices = @transform_2, window_bounds = array<i64: 8, 128>}]} {
    %c0 = arith.constant 0 : index
    %c0_0 = arith.constant 0 : index
    %0 = vector.load %arg1[%c0, %c0_0] : memref<8x8xi32, #tpu.memory_space<vmem>>, vector<8x8xi32>
    %1 = tpu.transpose %0, [1, 0] : vector<8x8xi32> -> vector<8x8xi32>
    %c0_1 = arith.constant 0 : index
    %c0_2 = arith.constant 0 : index
    %2 = vector.load %arg2[%c0_1, %c0_2] : memref<48x128xf32, #tpu.memory_space<vmem>>, vector<48x128xf32>
    %3 = tpu.iota {dimensions = array<i32: 1>} : vector<1x48xi32>
    %4 = vector.extract_strided_slice %1 {offsets = [0, 0], sizes = [8, 1], strides = [1, 1]} : vector<8x8xi32> to vector<8x1xi32>
    %5 = vector.broadcast %4 : vector<8x1xi32> to vector<8x48xi32>
    %6 = vector.broadcast %3 : vector<1x48xi32> to vector<8x48xi32>
    %7 = arith.cmpi eq, %5, %6 : vector<8x48xi32>
    %8 = vector.extract_strided_slice %1 {offsets = [0, 1], sizes = [8, 1], strides = [1, 1]} : vector<8x8xi32> to vector<8x1xi32>
    %9 = vector.broadcast %8 : vector<8x1xi32> to vector<8x48xi32>
    %10 = vector.broadcast %3 : vector<1x48xi32> to vector<8x48xi32>
    %11 = arith.cmpi eq, %9, %10 : vector<8x48xi32>
    %12 = arith.ori %7, %11 : vector<8x48xi1>
    %13 = vector.extract_strided_slice %1 {offsets = [0, 2], sizes = [8, 1], strides = [1, 1]} : vector<8x8xi32> to vector<8x1xi32>
    %14 = vector.broadcast %13 : vector<8x1xi32> to vector<8x48xi32>
    %15 = vector.broadcast %3 : vector<1x48xi32> to vector<8x48xi32>
    %16 = arith.cmpi eq, %14, %15 : vector<8x48xi32>
    %17 = arith.ori %12, %16 : vector<8x48xi1>
    %18 = vector.extract_strided_slice %1 {offsets = [0, 3], sizes = [8, 1], strides = [1, 1]} : vector<8x8xi32> to vector<8x1xi32>
    %19 = vector.broadcast %18 : vector<8x1xi32> to vector<8x48xi32>
    %20 = vector.broadcast %3 : vector<1x48xi32> to vector<8x48xi32>
    %21 = arith.cmpi eq, %19, %20 : vector<8x48xi32>
    %22 = arith.ori %17, %21 : vector<8x48xi1>
    %cst = arith.constant 1.000000e+00 : f32
    %cst_3 = arith.constant 0.000000e+00 : f32
    %23 = vector.broadcast %cst : f32 to vector<8x48xf32>
    %24 = vector.broadcast %cst_3 : f32 to vector<8x48xf32>
    %25 = arith.select %22, %23, %24 : vector<8x48xi1>, vector<8x48xf32>
    %cst_4 = arith.constant dense<0.000000e+00> : vector<8x128xf32>
    %26 = tpu.matmul %25, %2, %cst_4 {dimension_numbers = #tpu.dot_dimension_numbers<[1], [0], [0], [1], [0, 0, 1, 1], [], []>} : vector<8x48xf32>, vector<48x128xf32>, vector<8x128xf32> -> vector<8x128xf32>
    %c0_5 = arith.constant 0 : index
    %c0_6 = arith.constant 0 : index
    %27 = vector.load %arg3[%c0_5, %c0_6] : memref<8x128xf32, #tpu.memory_space<vmem>>, vector<8x128xf32>
    tpu.vector_store %arg3[%c0_5, %c0_6], %26 {strides = array<i32>} : memref<8x128xf32, #tpu.memory_space<vmem>>, vector<8x128xf32>,
    return
  }
  func.func @transform_0(%arg0: i32) -> (i32, i32) {
    %c0_i32 = arith.constant 0 : i32
    %c0_i32_0 = arith.constant 0 : i32
    return %c0_i32, %arg0 : i32, i32
  }
  func.func @transform_1(%arg0: i32) -> (i32, i32) {
    %c0_i32 = arith.constant 0 : i32
    %c0_i32_0 = arith.constant 0 : i32
    %c0_i32_1 = arith.constant 0 : i32
    return %c0_i32, %c0_i32_0 : i32, i32
  }
  func.func @transform_2(%arg0: i32) -> (i32, i32) {
    %c0_i32 = arith.constant 0 : i32
    %c0_i32_0 = arith.constant 0 : i32
    return %arg0, %c0_i32 : i32, i32
  }
}

</mosaic_0001>

<llo_original>
// kernel: apply.1
$region0: #{apply.1}
  #allocation0 [shape = 'u32[]', space=smem, size = 0x4, offset = 0x4, fixed_abs, tag = 'smem constant byte address 0x4 - core index']
  #allocation1 [shape = 'u32[72,128]{1,0:T(1,128)}', space=vmem, size = 0x9000, scoped, tag = 'internal scratch']
  %s0 = inlined_call_operand.vmem [shape: s32[8,8], index: 0, kind: input, shape index: {}]
  %s1 = inlined_call_operand.vmem [shape: f32[48,128], index: 1, kind: input, shape index: {}]
  %s2 = inlined_call_operand.vmem [shape: f32[8,128], index: 2, kind: output, shape index: {}]
  %s3 = sld [smem:[#allocation0]]
  $region18: #{apply.1} parent=0
    _
  %s5 = ssub.s32 1, %s3
  %s6 = scalar_select 0, %s5, %s3
  // Predicated region
  $region2: #{apply.1} parent=0 // pred_check
    _
  $region3: #{apply.1} parent=0 // pred_check_branch
    %8 = sbr.rel (0) target = $region5
  $region4: #{apply.1} parent=0 // pred_region
    _
  $region5: #{apply.1} parent=0 // pred_fallthru
    _
  // Predicated region
  $region6: #{apply.1} parent=0 // pred_check
    _
  $region7: #{apply.1} parent=0 // pred_check_branch
    %10 = sbr.rel (0) target = $region9
  $region8: #{apply.1} parent=0 // pred_region
    _
  $region9: #{apply.1} parent=0 // pred_fallthru
    _
  %v11 = vld [vmem:[%s0] sm:$0xff]
  %12 = vxpose.xlu0.b32.start [1/16] %v11, 128
  %13 = vxpose.xlu0.b32.cont [2/16] 0, 128
  %14 = vxpose.xlu0.b32.cont [3/16] 0, 128
  %15 = vxpose.xlu0.b32.cont [4/16] 0, 128
  %16 = vxpose.xlu0.b32.cont [5/16] 0, 128
  %17 = vxpose.xlu0.b32.cont [6/16] 0, 128
  %18 = vxpose.xlu0.b32.cont [7/16] 0, 128
  %19 = vxpose.xlu0.b32.cont [8/16] 0, 128
  %20 = vxpose.xlu0.b32.cont [9/16] 0, 128
  %21 = vxpose.xlu0.b32.cont [10/16] 0, 128
  %22 = vxpose.xlu0.b32.cont [11/16] 0, 128
  %23 = vxpose.xlu0.b32.cont [12/16] 0, 128
  %24 = vxpose.xlu0.b32.cont [13/16] 0, 128
  %25 = vxpose.xlu0.b32.cont [14/16] 0, 128
  %26 = vxpose.xlu0.b32.cont [15/16] 0, 128
  %27 = vxpose.xlu0.b32.end [16/16] 0, 128
  %v28 = vpop.trf.xlu0
  %v29 = vpop.trf.xlu0
  %v30 = vpop.trf.xlu0
  %v31 = vpop.trf.xlu0
  %v32 = vpop.trf.xlu0
  %v33 = vpop.trf.xlu0
  %v34 = vpop.trf.xlu0
  %v35 = vpop.trf.xlu0
  %v36 = vpop.trf.xlu0
  %v37 = vpop.trf.xlu0
  %v38 = vpop.trf.xlu0
  %v39 = vpop.trf.xlu0
  %v40 = vpop.trf.xlu0
  %v41 = vpop.trf.xlu0
  %v42 = vpop.trf.xlu0
  %v43 = vpop.trf.xlu0
  %v44 = vld [vmem:[%s1] sm:$0xff]
  %v45 = vld [vmem:[%s1 + $0x8] sm:$0xff]
  %v46 = vld [vmem:[%s1 + $0x10] sm:$0xff]
  %v47 = vld [vmem:[%s1 + $0x18] sm:$0xff]
  %v48 = vld [vmem:[%s1 + $0x20] sm:$0xff]
  %v49 = vld [vmem:[%s1 + $0x28] sm:$0xff]
  %v50 = vlaneseq
  %v51 = vand.u32 %v50, 127
  %52 = vset.pattern.permute.xlu0 0
  %53 = vperm.xlu0 %52, %v28
  %v54 = vpop.permute.xlu0 %53
  %vm55 = vcmp.eq.s32.totalorder %v54, %v51
  %56 = vset.pattern.permute.xlu0 1
  %57 = vperm.xlu0 %56, %v28
  %v58 = vpop.permute.xlu0 %57
  %vm59 = vcmp.eq.s32.totalorder %v58, %v51
  %vm60 = vmor %vm55, %vm59
  %61 = vset.pattern.permute.xlu0 2
  %62 = vperm.xlu0 %61, %v28
  %v63 = vpop.permute.xlu0 %62
  %vm64 = vcmp.eq.s32.totalorder %v63, %v51
  %vm65 = vmor %vm60, %vm64
  %66 = vset.pattern.permute.xlu0 3
  %67 = vperm.xlu0 %66, %v28
  %v68 = vpop.permute.xlu0 %67
  %vm69 = vcmp.eq.s32.totalorder %v68, %v51
  %vm70 = vmor %vm65, %vm69
  %v71 = vsel %vm70, 1.0, 0.0
  %vm72 = vcmask 392192
  %v74 = vsel %vm72, %v71, 0
  %76 = vmatpush.msra.mxu0 0.0
  %77 = vmatpush.msra.mxu0 0.0
  %78 = vmatpush.msra.mxu0 0.0
  %79 = vmatpush.msra.mxu0 0.0
  %80 = vmatpush.msra.mxu0 0.0
  %81 = vmatpush.msra.mxu0 0.0
  %82 = vmatpush.msra.mxu0 0.0
  %83 = vmatpush.msra.mxu0 0.0
  %84 = vmatpush.msra.mxu0 0.0
  %85 = vmatpush.msra.mxu0 0.0
  %86 = vmatpush.msra.mxu0 %v49
  %87 = vmatpush.msra.mxu0 %v48
  %88 = vmatpush.msra.mxu0 %v47
  %89 = vmatpush.msra.mxu0 %v46
  %90 = vmatpush.msra.mxu0 %v45
  %91 = vmatpush.msra.mxu0 %v44
  %92 = vmatmul.f32.gmra.mxu0 %v74
  %v93 = vpop.f32.mrf.mxu0
  %v94 = vadd.f32 0.0, %v93
  %95 = vdwg.mxu0
  %96 = vst [vmem:[%s2] sm:$0xff] %v94
  // Predicated region
  $region10: #{apply.1} parent=0 // pred_check
    _
  $region11: #{apply.1} parent=0 // pred_check_branch
    %98 = sbr.rel (0) target = $region13
  $region12: #{apply.1} parent=0 // pred_region
    _
  $region13: #{apply.1} parent=0 // pred_fallthru
    _
  // Predicated region
  $region14: #{apply.1} parent=0 // pred_check
    _
  $region15: #{apply.1} parent=0 // pred_check_branch
    %100 = sbr.rel (0) target = $region17
  $region16: #{apply.1} parent=0 // pred_region
    _
  $region17: #{apply.1} parent=0 // pred_fallthru
    _

</llo_original>
